<compile_context>
chip_gen: v6e
topology: v6e:2x2x1
jax: 0.10.0
libtpu: 0.0.40
codegen_flags: <defaults>
</compile_context>

<pallas_src>
import functools

import jax
import jax.numpy as jnp
from jax.experimental import pallas as pl
from jax.experimental.pallas import tpu as pltpu


# ------------------------- Linear (matmul + bias) kernel -----------------------

def _linear_kernel(x_ref, w_ref, b_ref, o_ref):
    """o = x @ w + b for one row-tile. x:(bm,K) w:(K,N) b:(1,N) o:(bm,N)."""
    acc = jnp.dot(x_ref[...], w_ref[...], preferred_element_type=jnp.float32)
    o_ref[...] = (acc + b_ref[...]).astype(o_ref.dtype)


def linear_pallas(x, w, b, *, block_m=256):
    """x:(M,K) @ w:(K,N) + b:(N,) -> (M,N).

    Tiles over M only; K and N are kept whole so the output tile is lane-dense
    (full width N). For the small shapes used here a single full block is emitted.
    """
    M, K = x.shape
    N = w.shape[1]
    bm = block_m if (M % block_m == 0) else M
    return pl.pallas_call(
        _linear_kernel,
        out_shape=jax.ShapeDtypeStruct((M, N), x.dtype),
        grid=(M // bm,),
        in_specs=[
            pl.BlockSpec((bm, K), lambda i: (i, 0)),
            pl.BlockSpec((K, N), lambda i: (0, 0)),
            pl.BlockSpec((1, N), lambda i: (0, 0)),
        ],
        out_specs=pl.BlockSpec((bm, N), lambda i: (i, 0)),
        compiler_params=pltpu.CompilerParams(dimension_semantics=("parallel",)),
    )(x, w, b.reshape(1, N))


# ------------------------- Multi-head attention core ---------------------------

def _mha_kernel(q_ref, k_ref, v_ref, o_ref, *, scale):
    """One grid step = one batch sample, all heads. Blocks are (1, H, N, D)."""
    q = q_ref[0].astype(jnp.float32)            # (H, N, D)
    k = k_ref[0].astype(jnp.float32)
    v = v_ref[0].astype(jnp.float32)
    # scores = q @ k^T * scale, per head (batched matmul on the MXU).
    s = jnp.einsum("hqd,hkd->hqk", q, k,
                   preferred_element_type=jnp.float32) * scale      # (H, N, N)
    # Numerically-stable softmax over keys, in f32.
    m = jnp.max(s, axis=-1, keepdims=True)
    p = jnp.exp(s - m)
    p = p / jnp.sum(p, axis=-1, keepdims=True)
    o = jnp.einsum("hqk,hkd->hqd", p, v,
                   preferred_element_type=jnp.float32)               # (H, N, D)
    o_ref[0] = o.astype(o_ref.dtype)


def mha_pallas(q, k, v, *, scale):
    """q, k, v: (B, H, N, D) -> (B, H, N, D)."""
    B, H, N, D = q.shape
    kernel = functools.partial(_mha_kernel, scale=scale)
    blk = (1, H, N, D)
    idx = lambda b: (b, 0, 0, 0)
    return pl.pallas_call(
        kernel,
        out_shape=jax.ShapeDtypeStruct((B, H, N, D), q.dtype),
        grid=(B,),
        in_specs=[pl.BlockSpec(blk, idx),
                  pl.BlockSpec(blk, idx),
                  pl.BlockSpec(blk, idx)],
        out_specs=pl.BlockSpec(blk, idx),
        compiler_params=pltpu.CompilerParams(dimension_semantics=("parallel",)),
    )(q, k, v)


# ------------------------- Full module forward ---------------------------------

def attention_forward(x, w_qkv, b_qkv, w_proj, b_proj, *, num_heads, xpos=None):
    """Pallas implementation of Attention.forward (rope=None, dropout p=0.0).

    Weights are in PyTorch nn.Linear layout: w_qkv (3C, C), w_proj (C, C).
    """
    del xpos  # TODO(synk): rope is None in the default config; RoPE not applied.
    B, N, C = x.shape
    H = num_heads
    D = C // H
    scale = float(D) ** -0.5

    # QKV projection (transpose the PyTorch (out, in) weight once, outside the kernel).
    qkv = linear_pallas(x.reshape(B * N, C), w_qkv.T, b_qkv)           # (B*N, 3C)

    # Split heads: matches qkv.reshape(B,N,3,H,D).transpose(1,3) then [:, :, i].
    qkv = qkv.reshape(B, N, 3, H, D)
    q = jnp.transpose(qkv[:, :, 0], (0, 2, 1, 3))                      # (B, H, N, D)
    k = jnp.transpose(qkv[:, :, 1], (0, 2, 1, 3))
    v = jnp.transpose(qkv[:, :, 2], (0, 2, 1, 3))

    o = mha_pallas(q, k, v, scale=scale)                               # (B, H, N, D)
    # TODO(synk): attn_drop / proj_drop have p=0.0 (identity); dropout omitted.

    o = jnp.transpose(o, (0, 2, 1, 3)).reshape(B * N, C)               # merge heads
    out = linear_pallas(o, w_proj.T, b_proj)                           # (B*N, C)
    return out.reshape(B, N, C)


if __name__ == "__main__":
    # Module config mirroring the PyTorch defaults: num_heads=8, qkv_bias=False,
    # attn_drop=0.0, proj_drop=0.0, rope=None. Small deterministic shapes.
    B, N, C = 2, 32, 128
    num_heads = 8
    qkv_bias = False

    key = jax.random.PRNGKey(0)
    k_x, k_wqkv, k_bqkv, k_wproj, k_bproj = jax.random.split(key, 5)
    x = jax.random.normal(k_x, (B, N, C), dtype=jnp.float32)
    w_qkv = jax.random.normal(k_wqkv, (3 * C, C), dtype=jnp.float32) * (C ** -0.5)
    b_qkv = (jax.random.normal(k_bqkv, (3 * C,), dtype=jnp.float32) * 0.02
             if qkv_bias else jnp.zeros((3 * C,), dtype=jnp.float32))
    w_proj = jax.random.normal(k_wproj, (C, C), dtype=jnp.float32) * (C ** -0.5)
    b_proj = jax.random.normal(k_bproj, (C,), dtype=jnp.float32) * 0.02

    out = attention_forward(x, w_qkv, b_qkv, w_proj, b_proj,
                            num_heads=num_heads, xpos=None)
    out = jax.block_until_ready(out)

    # Pure-JAX reference mirroring the PyTorch forward exactly.
    H, D = num_heads, C // num_heads
    scale = D ** -0.5
    qkv_ref = x @ w_qkv.T + b_qkv                                      # (B, N, 3C)
    qkv_ref = jnp.transpose(qkv_ref.reshape(B, N, 3, H, D), (0, 3, 2, 1, 4))
    q_r, k_r, v_r = qkv_ref[:, :, 0], qkv_ref[:, :, 1], qkv_ref[:, :, 2]
    attn = jax.nn.softmax((q_r @ jnp.swapaxes(k_r, -1, -2)) * scale, axis=-1)
    ref = jnp.transpose(attn @ v_r, (0, 2, 1, 3)).reshape(B, N, C)
    ref = ref @ w_proj.T + b_proj

    assert out.shape == (B, N, C) and out.dtype == x.dtype
    max_err = jnp.max(jnp.abs(out - ref))
    assert jnp.allclose(out, ref, atol=1e-4, rtol=1e-4), f"max abs err {max_err}"

    print("KERNEL_OK")
</pallas_src>

<mosaic_0001>
module attributes {stable_mosaic.version = 11 : i64} {
  func.func @_linear_kernel(%arg0: i32, %arg1: memref<64x128xf32, #tpu.memory_space<vmem>>, %arg2: memref<128x384xf32, #tpu.memory_space<vmem>>, %arg3: memref<1x384xf32, #tpu.memory_space<vmem>>, %arg4: memref<64x384xf32, #tpu.memory_space<vmem>>) attributes {dimension_semantics = [#tpu.dimension_semantics<parallel>], iteration_bounds = array<i64: 1>, scalar_prefetch = 0 : i64, scratch_operands = 0 : i64, tpu.core_type = #tpu.core_type<tc>, window_params = [{transform_indices = @transform_0, window_bounds = array<i64: 64, 128>}, {pipeline_mode = #tpu.pipeline_mode<synchronous>, transform_indices = @transform_1, window_bounds = array<i64: 128, 384>}, {pipeline_mode = #tpu.pipeline_mode<synchronous>, transform_indices = @transform_2, window_bounds = array<i64: 1, 384>}, {transform_indices = @transform_3, window_bounds = array<i64: 64, 384>}]} {
    %c0 = arith.constant 0 : index
    %c0_0 = arith.constant 0 : index
    %0 = vector.load %arg1[%c0, %c0_0] : memref<64x128xf32, #tpu.memory_space<vmem>>, vector<64x128xf32>
    %c0_1 = arith.constant 0 : index
    %c0_2 = arith.constant 0 : index
    %1 = vector.load %arg2[%c0_1, %c0_2] : memref<128x384xf32, #tpu.memory_space<vmem>>, vector<128x384xf32>
    %cst = arith.constant dense<0.000000e+00> : vector<64x384xf32>
    %2 = tpu.matmul %0, %1, %cst {dimension_numbers = #tpu.dot_dimension_numbers<[1], [0], [0], [1], [0, 0, 1, 1], [], []>} : vector<64x128xf32>, vector<128x384xf32>, vector<64x384xf32> -> vector<64x384xf32>
    %c0_3 = arith.constant 0 : index
    %c0_4 = arith.constant 0 : index
    %3 = vector.load %arg3[%c0_3, %c0_4] : memref<1x384xf32, #tpu.memory_space<vmem>>, vector<1x384xf32>
    %4 = vector.broadcast %3 : vector<1x384xf32> to vector<64x384xf32>
    %5 = arith.addf %2, %4 : vector<64x384xf32>
    %c0_5 = arith.constant 0 : index
    %c0_6 = arith.constant 0 : index
    %6 = vector.load %arg4[%c0_5, %c0_6] : memref<64x384xf32, #tpu.memory_space<vmem>>, vector<64x384xf32>
    tpu.vector_store %arg4[%c0_5, %c0_6], %5 {strides = array<i32>} : memref<64x384xf32, #tpu.memory_space<vmem>>, vector<64x384xf32>,
    return
  }
  func.func @transform_0(%arg0: i32) -> (i32, i32) {
    %c0_i32 = arith.constant 0 : i32
    %c0_i32_0 = arith.constant 0 : i32
    return %arg0, %c0_i32 : i32, i32
  }
  func.func @transform_1(%arg0: i32) -> (i32, i32) {
    %c0_i32 = arith.constant 0 : i32
    %c0_i32_0 = arith.constant 0 : i32
    %c0_i32_1 = arith.constant 0 : i32
    return %c0_i32, %c0_i32_0 : i32, i32
  }
  func.func @transform_2(%arg0: i32) -> (i32, i32) {
    %c0_i32 = arith.constant 0 : i32
    %c0_i32_0 = arith.constant 0 : i32
    %c0_i32_1 = arith.constant 0 : i32
    return %c0_i32, %c0_i32_0 : i32, i32
  }
  func.func @transform_3(%arg0: i32) -> (i32, i32) {
    %c0_i32 = arith.constant 0 : i32
    %c0_i32_0 = arith.constant 0 : i32
    return %arg0, %c0_i32 : i32, i32
  }
}

</mosaic_0001>

<llo_original>
// kernel: tpu_custom_call.1
$region0: #{tpu_custom_call.1}
  #allocation0 [shape = 'u32[]', space=smem, size = 0x4, offset = 0x4, fixed_abs, tag = 'smem constant byte address 0x4 - core index']
  #allocation1 [shape = 'u32[144,128]{1,0:T(1,128)}', space=vmem, size = 0x12000, scoped, tag = 'internal scratch']
  %s0 = inlined_call_operand.hbm [shape: f32[64,128], index: 0, kind: input, shape index: {}]
  %s1 = inlined_call_operand.hbm [shape: f32[128,384], index: 1, kind: input, shape index: {}]
  %s2 = inlined_call_operand.vmem [shape: f32[1,384], index: 2, kind: input, shape index: {}]
  %s3 = inlined_call_operand.hbm [shape: f32[64,384], index: 3, kind: output, shape index: {}]
  %s4 = sld [smem:[#allocation0]]
  $region30: #{tpu_custom_call.1} parent=0
    _
  %s6 = ssub.s32 1, %s4
  %s7 = scalar_select 0, %s6, %s4
  $region1: #{tpu_custom_call.1} parent=0
    #allocation2 [shape = 'u8[32768]{0}', space=vmem, size = 0x8000, scoped, tag = 'input window, operand 0, single buffered']
    #allocation3 [shape = 's32[1]{0}', space=sflag, size = 0x4, scoped, tag = 'scoped memory for tpu_custom_call.1']
    #allocation4 [shape = 's32[1]{0}', space=sflag, size = 0x4, scoped, tag = 'scoped memory for tpu_custom_call.1']
    #allocation5 [shape = 'u8[196608]{0}', space=vmem, size = 0x30000, scoped, tag = 'input window, operand 1, single buffered']
    #allocation6 [shape = 's32[1]{0}', space=sflag, size = 0x4, scoped, tag = 'scoped memory for tpu_custom_call.1']
    #allocation7 [shape = 'u8[98304]{0}', space=vmem, size = 0x18000, scoped, tag = 'output window, operand 0, single buffered']
    %8 = vsyncpa [#allocation3], 0
    %9 = vsyncpa [#allocation6], 0
    %10 = vsyncpa [#allocation4], 0
    // Predicated region
    $region2: #{tpu_custom_call.1} parent=1 // pred_check
      _
    $region3: #{tpu_custom_call.1} parent=1 // pred_check_branch
      %12 = sbr.rel (0) target = $region5
    $region4: #{tpu_custom_call.1} parent=1 // pred_region
      %s14 = ssub.s32 1024, 1024
      %15 = vsyncadd [#allocation3], %s14
      %s16 = sshll.u32 [#allocation2], 4
      %s17 = int_to_ptr.vmem [resolvable:$true] %s16
      %22 = dma.hbm_to_vmem [thread:$0]  %s0, 1024, %s17, [#allocation3], 128, 128, 8
    $region5: #{tpu_custom_call.1} parent=1 // pred_fallthru
      _
    // Predicated region
    $region6: #{tpu_custom_call.1} parent=1 // pred_check
      _
    $region7: #{tpu_custom_call.1} parent=1 // pred_check_branch
      %24 = sbr.rel (0) target = $region9
    $region8: #{tpu_custom_call.1} parent=1 // pred_region
      %s26 = ssub.s32 6144, 6144
      %27 = vsyncadd [#allocation6], %s26
      %s28 = sshll.u32 [#allocation5], 4
      %s29 = int_to_ptr.vmem [resolvable:$true] %s28
      %34 = dma.hbm_to_vmem [thread:$0]  %s1, 6144, %s29, [#allocation6], 384, 384, 24
    $region9: #{tpu_custom_call.1} parent=1 // pred_fallthru
      _
    // Predicated region
    $region10: #{tpu_custom_call.1} parent=1 // pred_check
      _
    $region11: #{tpu_custom_call.1} parent=1 // pred_check_branch
      %36 = sbr.rel (0) target = $region13
    $region12: #{tpu_custom_call.1} parent=1 // pred_region
      _
    $region13: #{tpu_custom_call.1} parent=1 // pred_fallthru
      _
    // Predicated region
    $region14: #{tpu_custom_call.1} parent=1 // pred_check
      _
    $region15: #{tpu_custom_call.1} parent=1 // pred_check_branch
      %38 = sbr.rel (0) target = $region17
    $region16: #{tpu_custom_call.1} parent=1 // pred_region
      %39 = dma.done [#allocation3], 1024
    $region17: #{tpu_custom_call.1} parent=1 // pred_fallthru
      _
    // Predicated region
    $region18: #{tpu_custom_call.1} parent=1 // pred_check
      _
    $region19: #{tpu_custom_call.1} parent=1 // pred_check_branch
      %41 = sbr.rel (0) target = $region21
    $region20: #{tpu_custom_call.1} parent=1 // pred_region
      %42 = dma.done [#allocation6], 6144
    $region21: #{tpu_custom_call.1} parent=1 // pred_fallthru
      _
    %v43 = vld [vmem:[#allocation2] sm:$0xff]
    %v44 = vld [vmem:[#allocation2 + $0x8] sm:$0xff]
    %v45 = vld [vmem:[#allocation2 + $0x10] sm:$0xff]
    %v46 = vld [vmem:[#allocation2 + $0x18] sm:$0xff]
    %v47 = vld [vmem:[#allocation2 + $0x20] sm:$0xff]
    %v48 = vld [vmem:[#allocation2 + $0x28] sm:$0xff]
    %v49 = vld [vmem:[#allocation2 + $0x30] sm:$0xff]
    %v50 = vld [vmem:[#allocation2 + $0x38] sm:$0xff]
    %v51 = vld [vmem:[#allocation5] sm:$0xff]
    %v52 = vld [vmem:[#allocation5 + $0x8] sm:$0xff]
    %v53 = vld [vmem:[#allocation5 + $0x10] sm:$0xff]
    %v54 = vld [vmem:[#allocation5 + $0x18] sm:$0xff]
    %v55 = vld [vmem:[#allocation5 + $0x20] sm:$0xff]
    %v56 = vld [vmem:[#allocation5 + $0x28] sm:$0xff]
    %v57 = vld [vmem:[#allocation5 + $0x30] sm:$0xff]
    %v58 = vld [vmem:[#allocation5 + $0x38] sm:$0xff]
    %v59 = vld [vmem:[#allocation5 + $0x40] sm:$0xff]
    %v60 = vld [vmem:[#allocation5 + $0x48] sm:$0xff]
    %v61 = vld [vmem:[#allocation5 + $0x50] sm:$0xff]
    %v62 = vld [vmem:[#allocation5 + $0x58] sm:$0xff]
    %v63 = vld [vmem:[#allocation5 + $0x60] sm:$0xff]
    %v64 = vld [vmem:[#allocation5 + $0x68] sm:$0xff]
    %v65 = vld [vmem:[#allocation5 + $0x70] sm:$0xff]
    %v66 = vld [vmem:[#allocation5 + $0x78] sm:$0xff]
    %v67 = vld [vmem:[#allocation5 + $0x80] sm:$0xff]
    %v68 = vld [vmem:[#allocation5 + $0x88] sm:$0xff]
    %v69 = vld [vmem:[#allocation5 + $0x90] sm:$0xff]
    %v70 = vld [vmem:[#allocation5 + $0x98] sm:$0xff]
    %v71 = vld [vmem:[#allocation5 + $0xa0] sm:$0xff]
    %v72 = vld [vmem:[#allocation5 + $0xa8] sm:$0xff]
    %v73 = vld [vmem:[#allocation5 + $0xb0] sm:$0xff]
    %v74 = vld [vmem:[#allocation5 + $0xb8] sm:$0xff]
    %v75 = vld [vmem:[#allocation5 + $0xc0] sm:$0xff]
    %v76 = vld [vmem:[#allocation5 + $0xc8] sm:$0xff]
    %v77 = vld [vmem:[#allocation5 + $0xd0] sm:$0xff]
    %v78 = vld [vmem:[#allocation5 + $0xd8] sm:$0xff]
    %v79 = vld [vmem:[#allocation5 + $0xe0] sm:$0xff]
    %v80 = vld [vmem:[#allocation5 + $0xe8] sm:$0xff]
    %v81 = vld [vmem:[#allocation5 + $0xf0] sm:$0xff]
    %v82 = vld [vmem:[#allocation5 + $0xf8] sm:$0xff]
    %v83 = vld [vmem:[#allocation5 + $0x100] sm:$0xff]
    %v84 = vld [vmem:[#allocation5 + $0x108] sm:$0xff]
    %v85 = vld [vmem:[#allocation5 + $0x110] sm:$0xff]
    %v86 = vld [vmem:[#allocation5 + $0x118] sm:$0xff]
    %v87 = vld [vmem:[#allocation5 + $0x120] sm:$0xff]
    %v88 = vld [vmem:[#allocation5 + $0x128] sm:$0xff]
    %v89 = vld [vmem:[#allocation5 + $0x130] sm:$0xff]
    %v90 = vld [vmem:[#allocation5 + $0x138] sm:$0xff]
    %v91 = vld [vmem:[#allocation5 + $0x140] sm:$0xff]
    %v92 = vld [vmem:[#allocation5 + $0x148] sm:$0xff]
    %v93 = vld [vmem:[#allocation5 + $0x150] sm:$0xff]
    %v94 = vld [vmem:[#allocation5 + $0x158] sm:$0xff]
    %v95 = vld [vmem:[#allocation5 + $0x160] sm:$0xff]
    %v96 = vld [vmem:[#allocation5 + $0x168] sm:$0xff]
    %v97 = vld [vmem:[#allocation5 + $0x170] sm:$0xff]
    %v98 = vld [vmem:[#allocation5 + $0x178] sm:$0xff]
    %v99 = vld [vmem:[%s2] sm:$0x7]
    %v101 = vlaneseq
    %v102 = vshrl.u32 %v101, 7
    %v103 = vsub.s32 0, %v102
    %v104 = vrot.slane %v99, %v103
    %v105 = vlaneseq
    %v106 = vshrl.u32 %v105, 7
    %v107 = vsub.s32 1, %v106
    %v108 = vrot.slane %v99, %v107
    %v109 = vlaneseq
    %v110 = vshrl.u32 %v109, 7
    %v111 = vsub.s32 2, %v110
    %v112 = vrot.slane %v99, %v111
    %116 = vmatprep.subr.mxu0 %v97
    %117 = vmatpush1.msra.mxu0 %v96
    %118 = vmatprep.subr.mxu0 %v94
    %119 = vmatpush1.msra.mxu0 %v93
    %120 = vmatprep.subr.mxu0 %v91
    %121 = vmatpush1.msra.mxu0 %v90
    %122 = vmatprep.subr.mxu0 %v88
    %123 = vmatpush1.msra.mxu0 %v87
    %124 = vmatprep.subr.mxu0 %v85
    %125 = vmatpush1.msra.mxu0 %v84
    %126 = vmatprep.subr.mxu0 %v82
    %127 = vmatpush1.msra.mxu0 %v81
    %128 = vmatprep.subr.mxu0 %v79
    %129 = vmatpush1.msra.mxu0 %v78
    %130 = vmatprep.subr.mxu0 %v76
    %131 = vmatpush1.msra.mxu0 %v75
    %132 = vmatprep.subr.mxu0 %v73
    %133 = vmatpush1.msra.mxu0 %v72
    %134 = vmatprep.subr.mxu0 %v70
    %135 = vmatpush1.msra.mxu0 %v69
    %136 = vmatprep.subr.mxu0 %v67
    %137 = vmatpush1.msra.mxu0 %v66
    %138 = vmatprep.subr.mxu0 %v64
    %139 = vmatpush1.msra.mxu0 %v63
    %140 = vmatprep.subr.mxu0 %v61
    %141 = vmatpush1.msra.mxu0 %v60
    %142 = vmatprep.subr.mxu0 %v58
    %143 = vmatpush1.msra.mxu0 %v57
    %144 = vmatprep.subr.mxu0 %v55
    %145 = vmatpush1.msra.mxu0 %v54
    %146 = vmatprep.subr.mxu0 %v52
    %147 = vmatpush1.msra.mxu0 %v51
    %148 = vmatprep.subr.mxu0 0.0
    %149 = vmatpush2.msra.mxu0 0.0
    %150 = vmatprep.subr.mxu0 0.0
    %151 = vmatpush2.msra.mxu0 0.0
    %152 = vmatprep.subr.mxu0 0.0
    %153 = vmatpush2.msra.mxu0 0.0
    %154 = vmatprep.subr.mxu0 0.0
    %155 = vmatpush2.msra.mxu0 0.0
    %156 = vmatprep.subr.mxu0 0.0
    %157 = vmatpush2.msra.mxu0 0.0
    %158 = vmatprep.subr.mxu0 0.0
    %159 = vmatpush2.msra.mxu0 0.0
    %160 = vmatprep.subr.mxu0 0.0
    %161 = vmatpush2.msra.mxu0 0.0
    %162 = vmatprep.subr.mxu0 0.0
    %163 = vmatpush2.msra.mxu0 0.0
    %164 = vmatprep.subr.mxu0 0.0
    %165 = vmatpush2.msra.mxu0 0.0
    %166 = vmatprep.subr.mxu0 0.0
    %167 = vmatpush2.msra.mxu0 0.0
    %168 = vmatprep.subr.mxu0 0.0
    %169 = vmatpush2.msra.mxu0 0.0
    %170 = vmatprep.subr.mxu0 0.0
    %171 = vmatpush2.msra.mxu0 0.0
    %172 = vmatprep.subr.mxu0 0.0
    %173 = vmatpush2.msra.mxu0 0.0
    %174 = vmatprep.subr.mxu0 0.0
    %175 = vmatpush2.msra.mxu0 0.0
    %176 = vmatprep.subr.mxu0 0.0
    %177 = vmatpush2.msra.mxu0 0.0
    %178 = vmatprep.subr.mxu0 0.0
    %179 = vmatpush2.msra.mxu0 0.0
    %180 = vmatprep.mubr.f32.mxu0 0.0
    %181 = vmatmul.mubr.f32.gmra.mxu0 %v43
    %v182 = vpop.f32.mrf.mxu0
    %v183 = vadd.f32 %v104, %v182
    %v184 = vpop.f32.mrf.mxu0
    %v185 = vadd.f32 %v108, %v184
    %186 = vmatprep.mubr.f32.mxu0 0.0
    %187 = vmatmul.mubr.f32.gmra.mxu0 %v44
    %v188 = vpop.f32.mrf.mxu0
    %v189 = vadd.f32 %v104, %v188
    %v190 = vpop.f32.mrf.mxu0
    %v191 = vadd.f32 %v108, %v190
    %192 = vmatprep.mubr.f32.mxu0 0.0
    %193 = vmatmul.mubr.f32.gmra.mxu0 %v45
    %v194 = vpop.f32.mrf.mxu0
    %v195 = vadd.f32 %v104, %v194
    %v196 = vpop.f32.mrf.mxu0
    %v197 = vadd.f32 %v108, %v196
    %198 = vmatprep.mubr.f32.mxu0 0.0
    %199 = vmatmul.mubr.f32.gmra.mxu0 %v46
    %v200 = vpop.f32.mrf.mxu0
    %v201 = vadd.f32 %v104, %v200
    %v202 = vpop.f32.mrf.mxu0
    %v203 = vadd.f32 %v108, %v202
    %204 = vmatprep.mubr.f32.mxu0 0.0
    %205 = vmatmul.mubr.f32.gmra.mxu0 %v47
    %v206 = vpop.f32.mrf.mxu0
    %v207 = vadd.f32 %v104, %v206
    %v208 = vpop.f32.mrf.mxu0
    %v209 = vadd.f32 %v108, %v208
    %210 = vmatprep.mubr.f32.mxu0 0.0
    %211 = vmatmul.mubr.f32.gmra.mxu0 %v48
    %v212 = vpop.f32.mrf.mxu0
    %v213 = vadd.f32 %v104, %v212
    %v214 = vpop.f32.mrf.mxu0
    %v215 = vadd.f32 %v108, %v214
    %216 = vmatprep.mubr.f32.mxu0 0.0
    %217 = vmatmul.mubr.f32.gmra.mxu0 %v49
    %v218 = vpop.f32.mrf.mxu0
    %v219 = vadd.f32 %v104, %v218
    %v220 = vpop.f32.mrf.mxu0
    %v221 = vadd.f32 %v108, %v220
    %222 = vmatprep.mubr.f32.mxu0 0.0
    %223 = vmatmul.mubr.f32.gmra.mxu0 %v50
    %v224 = vpop.f32.mrf.mxu0
    %v225 = vadd.f32 %v104, %v224
    %v226 = vpop.f32.mrf.mxu0
    %v227 = vadd.f32 %v108, %v226
    %228 = vdwg.mxu0
    %229 = vmatprep.subr.mxu0 0.0
    %230 = vmatpush1.msra.mxu0 %v98
    %231 = vmatprep.subr.mxu0 0.0
    %232 = vmatpush1.msra.mxu0 %v95
    %233 = vmatprep.subr.mxu0 0.0
    %234 = vmatpush1.msra.mxu0 %v92
    %235 = vmatprep.subr.mxu0 0.0
    %236 = vmatpush1.msra.mxu0 %v89
    %237 = vmatprep.subr.mxu0 0.0
    %238 = vmatpush1.msra.mxu0 %v86
    %239 = vmatprep.subr.mxu0 0.0
    %240 = vmatpush1.msra.mxu0 %v83
    %241 = vmatprep.subr.mxu0 0.0
    %242 = vmatpush1.msra.mxu0 %v80
    %243 = vmatprep.subr.mxu0 0.0
    %244 = vmatpush1.msra.mxu0 %v77
    %245 = vmatprep.subr.mxu0 0.0
    %246 = vmatpush1.msra.mxu0 %v74
    %247 = vmatprep.subr.mxu0 0.0
    %248 = vmatpush1.msra.mxu0 %v71
    %249 = vmatprep.subr.mxu0 0.0
    %250 = vmatpush1.msra.mxu0 %v68
    %251 = vmatprep.subr.mxu0 0.0
    %252 = vmatpush1.msra.mxu0 %v65
    %253 = vmatprep.subr.mxu0 0.0
    %254 = vmatpush1.msra.mxu0 %v62
    %255 = vmatprep.subr.mxu0 0.0
    %256 = vmatpush1.msra.mxu0 %v59
    %257 = vmatprep.subr.mxu0 0.0
    %258 = vmatpush1.msra.mxu0 %v56
    %259 = vmatprep.subr.mxu0 0.0
    %260 = vmatpush1.msra.mxu0 %v53
    %261 = vmatprep.subr.mxu0 0.0
    %262 = vmatpush2.msra.mxu0 0.0
    %263 = vmatprep.subr.mxu0 0.0
    %264 = vmatpush2.msra.mxu0 0.0
    %265 = vmatprep.subr.mxu0 0.0
    %266 = vmatpush2.msra.mxu0 0.0
    %267 = vmatprep.subr.mxu0 0.0
    %268 = vmatpush2.msra.mxu0 0.0
    %269 = vmatprep.subr.mxu0 0.0
    %270 = vmatpush2.msra.mxu0 0.0
    %271 = vmatprep.subr.mxu0 0.0
    %272 = vmatpush2.msra.mxu0 0.0
    %273 = vmatprep.subr.mxu0 0.0
    %274 = vmatpush2.msra.mxu0 0.0
    %275 = vmatprep.subr.mxu0 0.0
    %276 = vmatpush2.msra.mxu0 0.0
    %277 = vmatprep.subr.mxu0 0.0
    %278 = vmatpush2.msra.mxu0 0.0
    %279 = vmatprep.subr.mxu0 0.0
    %280 = vmatpush2.msra.mxu0 0.0
    %281 = vmatprep.subr.mxu0 0.0
    %282 = vmatpush2.msra.mxu0 0.0
    %283 = vmatprep.subr.mxu0 0.0
    %284 = vmatpush2.msra.mxu0 0.0
    %285 = vmatprep.subr.mxu0 0.0
    %286 = vmatpush2.msra.mxu0 0.0
    %287 = vmatprep.subr.mxu0 0.0
    %288 = vmatpush2.msra.mxu0 0.0
    %289 = vmatprep.subr.mxu0 0.0
    %290 = vmatpush2.msra.mxu0 0.0
    %291 = vmatprep.subr.mxu0 0.0
    %292 = vmatpush2.msra.mxu0 0.0
    %293 = vmatprep.mubr.f32.mxu0 0.0
    %294 = vmatmul.mubr.f32.gmra.mxu0 %v43
    %v295 = vpop.f32.mrf.mxu0
    %v296 = vadd.f32 %v112, %v295
    %v297 = vpop.f32.mrf.mxu0
    %298 = vmatprep.mubr.f32.mxu0 0.0
    %299 = vmatmul.mubr.f32.gmra.mxu0 %v44
    %v300 = vpop.f32.mrf.mxu0
    %v301 = vadd.f32 %v112, %v300
    %v302 = vpop.f32.mrf.mxu0
    %303 = vmatprep.mubr.f32.mxu0 0.0
    %304 = vmatmul.mubr.f32.gmra.mxu0 %v45
    %v305 = vpop.f32.mrf.mxu0
    %v306 = vadd.f32 %v112, %v305
    %v307 = vpop.f32.mrf.mxu0
    %308 = vmatprep.mubr.f32.mxu0 0.0
    %309 = vmatmul.mubr.f32.gmra.mxu0 %v46
    %v310 = vpop.f32.mrf.mxu0
    %v311 = vadd.f32 %v112, %v310
    %v312 = vpop.f32.mrf.mxu0
    %313 = vmatprep.mubr.f32.mxu0 0.0
    %314 = vmatmul.mubr.f32.gmra.mxu0 %v47
    %v315 = vpop.f32.mrf.mxu0
    %v316 = vadd.f32 %v112, %v315
    %v317 = vpop.f32.mrf.mxu0
    %318 = vmatprep.mubr.f32.mxu0 0.0
    %319 = vmatmul.mubr.f32.gmra.mxu0 %v48
    %v320 = vpop.f32.mrf.mxu0
    %v321 = vadd.f32 %v112, %v320
    %v322 = vpop.f32.mrf.mxu0
    %323 = vmatprep.mubr.f32.mxu0 0.0
    %324 = vmatmul.mubr.f32.gmra.mxu0 %v49
    %v325 = vpop.f32.mrf.mxu0
    %v326 = vadd.f32 %v112, %v325
    %v327 = vpop.f32.mrf.mxu0
    %328 = vmatprep.mubr.f32.mxu0 0.0
    %329 = vmatmul.mubr.f32.gmra.mxu0 %v50
    %v330 = vpop.f32.mrf.mxu0
    %v331 = vadd.f32 %v112, %v330
    %v332 = vpop.f32.mrf.mxu0
    %333 = vdwg.mxu0
    %334 = vst [vmem:[#allocation7] sm:$0xff] %v183
    %335 = vst [vmem:[#allocation7 + $0x8] sm:$0xff] %v185
    %336 = vst [vmem:[#allocation7 + $0x10] sm:$0xff] %v296
    %337 = vst [vmem:[#allocation7 + $0x18] sm:$0xff] %v189
    %338 = vst [vmem:[#allocation7 + $0x20] sm:$0xff] %v191
    %339 = vst [vmem:[#allocation7 + $0x28] sm:$0xff] %v301
    %340 = vst [vmem:[#allocation7 + $0x30] sm:$0xff] %v195
    %341 = vst [vmem:[#allocation7 + $0x38] sm:$0xff] %v197
    %342 = vst [vmem:[#allocation7 + $0x40] sm:$0xff] %v306
    %343 = vst [vmem:[#allocation7 + $0x48] sm:$0xff] %v201
    %344 = vst [vmem:[#allocation7 + $0x50] sm:$0xff] %v203
    %345 = vst [vmem:[#allocation7 + $0x58] sm:$0xff] %v311
    %346 = vst [vmem:[#allocation7 + $0x60] sm:$0xff] %v207
    %347 = vst [vmem:[#allocation7 + $0x68] sm:$0xff] %v209
    %348 = vst [vmem:[#allocation7 + $0x70] sm:$0xff] %v316
    %349 = vst [vmem:[#allocation7 + $0x78] sm:$0xff] %v213
    %350 = vst [vmem:[#allocation7 + $0x80] sm:$0xff] %v215
    %351 = vst [vmem:[#allocation7 + $0x88] sm:$0xff] %v321
    %352 = vst [vmem:[#allocation7 + $0x90] sm:$0xff] %v219
    %353 = vst [vmem:[#allocation7 + $0x98] sm:$0xff] %v221
    %354 = vst [vmem:[#allocation7 + $0xa0] sm:$0xff] %v326
    %355 = vst [vmem:[#allocation7 + $0xa8] sm:$0xff] %v225
    %356 = vst [vmem:[#allocation7 + $0xb0] sm:$0xff] %v227
    %357 = vst [vmem:[#allocation7 + $0xb8] sm:$0xff] %v331
    // Predicated region
    $region22: #{tpu_custom_call.1} parent=1 // pred_check
      _
    $region23: #{tpu_custom_call.1} parent=1 // pred_check_branch
      %359 = sbr.rel (0) target = $region25
    $region24: #{tpu_custom_call.1} parent=1 // pred_region
      %s361 = ssub.s32 3072, 3072
      %362 = vsyncadd [#allocation4], %s361
      %s363 = sshll.u32 [#allocation7], 4
      %s364 = int_to_ptr.vmem [resolvable:$true] %s363
      %369 = dma.vmem_to_hbm [thread:$0]  %s364, 3072, %s3, [#allocation4], 384, 384, 24
    $region25: #{tpu_custom_call.1} parent=1 // pred_fallthru
      _
    // Predicated region
    $region26: #{tpu_custom_call.1} parent=1 // pred_check
      _
    $region27: #{tpu_custom_call.1} parent=1 // pred_check_branch
      %371 = sbr.rel (0) target = $region29
    $region28: #{tpu_custom_call.1} parent=1 // pred_region
      %372 = dma.done [#allocation4], 3072
    $region29: #{tpu_custom_call.1} parent=1 // pred_fallthru
      _
    %373 = vsyncpa [#allocation3], 1
    %374 = vsyncpa [#allocation6], 1
    %375 = vsyncpa [#allocation4], 1

</llo_original>
